<compile_context>
chip_gen: v7x
topology: tpu7x:2x2x1
jax: 0.10.0
libtpu: 0.0.40
codegen_flags: <defaults>
</compile_context>

<pallas_src>
import jax
import jax.numpy as jnp
from jax.experimental import pallas as pl
from jax.experimental.pallas import tpu as pltpu


_VMEM_BUDGET = 48 << 20  # bytes; safe on v5e/v6e (128 MiB phys) and v7x (64 MiB phys)


def _round_up(x, m):
    return ((x + m - 1) // m) * m


def _pick_tm(M, K, Nout, out_itemsize, tm_max=1024, budget=_VMEM_BUDGET):
    """Pick the M tile.

    - If M fits in one tile, split it in two (when >=16) so a 'parallel' grid
      axis of extent >=2 can be sharded across both v7x TensorCores.
    - Otherwise take the largest multiple of 8 (<= tm_max) whose
      double-buffered x-tile + output-tile(s) plus the resident weights fit
      the VMEM budget.
    """
    per_row = 2 * (2 * K + out_itemsize * Nout)          # dbl-buffered x + out rows
    w_bytes = 2 * (2 * K * Nout + 4 * Nout)              # resident bf16 W + f32 b (x2 slack)
    avail = budget - w_bytes - (4 << 20)                 # compiler scratch headroom
    tm_fit = max(8, min(tm_max, avail // max(per_row, 1)))
    tm_fit = max(8, (int(tm_fit) // 8) * 8)
    if M <= tm_fit:
        if M >= 16:
            return _round_up((M + 1) // 2, 8)            # >=2 tiles -> megacore
        return M                                          # full-dim block (layout-legal)
    return tm_fit


# --------------------------------------------------------------------------
# Kernels
# --------------------------------------------------------------------------
def _linear_kernel(x_ref, w_ref, b_ref, o_ref):
    # One full-K MXU matmul per M tile; bias added once, in f32.
    o_ref[...] = (
        jnp.dot(x_ref[...], w_ref[...], preferred_element_type=jnp.float32)
        + b_ref[...]
    ).astype(o_ref.dtype)


def _fused_qkv_kernel(x_ref, wq_ref, wkv_ref, bq_ref, bkv_ref, q_ref, kv_ref):
    # x is read from HBM/VMEM once and reused for both projections; q and kv
    # are written to separate lane-dense output slabs (no post-kernel slice).
    x = x_ref[...]
    q_ref[...] = (
        jnp.dot(x, wq_ref[...], preferred_element_type=jnp.float32) + bq_ref[...]
    ).astype(q_ref.dtype)
    kv_ref[...] = (
        jnp.dot(x, wkv_ref[...], preferred_element_type=jnp.float32) + bkv_ref[...]
    ).astype(kv_ref.dtype)


# --------------------------------------------------------------------------
# Wrappers
# --------------------------------------------------------------------------
def linear_pallas(x2d, w_bf16, b_f32row, *, out_dtype=None):
    """y = x2d @ W + b.  Full-K / full-N blocks, resident weights, bf16 MXU
    inputs, f32 accumulation, grid only over M."""
    M, K = x2d.shape
    K2, Nout = w_bf16.shape
    assert K == K2
    if out_dtype is None:
        out_dtype = x2d.dtype
    out_itemsize = jnp.dtype(out_dtype).itemsize

    xb = x2d.astype(jnp.bfloat16)
    tm = _pick_tm(M, K, Nout, out_itemsize)
    grid_m = pl.cdiv(M, tm)

    cost = pl.CostEstimate(
        flops=2 * M * K * Nout,
        transcendentals=0,
        bytes_accessed=M * K * 2 + K * Nout * 2 + Nout * 4 + M * Nout * out_itemsize,
    )

    return pl.pallas_call(
        _linear_kernel,
        out_shape=jax.ShapeDtypeStruct((M, Nout), out_dtype),
        grid_spec=pltpu.PrefetchScalarGridSpec(
            num_scalar_prefetch=0,
            grid=(grid_m,),
            in_specs=[
                pl.BlockSpec((tm, K), lambda i: (i, 0)),
                pl.BlockSpec((K, Nout), lambda i: (0, 0)),   # resident weight
                pl.BlockSpec((1, Nout), lambda i: (0, 0)),   # resident bias
            ],
            out_specs=pl.BlockSpec((tm, Nout), lambda i: (i, 0)),
        ),
        compiler_params=pltpu.CompilerParams(
            dimension_semantics=("parallel",),
            vmem_limit_bytes=_VMEM_BUDGET,
        ),
        cost_estimate=cost,
    )(xb, w_bf16, b_f32row)


def fused_qkv_pallas(x2d, wq_bf16, wkv_bf16, bq_f32row, bkv_f32row, *, out_dtype=None):
    """Self-attention path: q and kv projections in one pallas_call with two
    separate outputs (q slab (M, inner) and kv slab (M, 2*inner))."""
    M, K = x2d.shape
    inner = wq_bf16.shape[1]
    Nout = 3 * inner
    if out_dtype is None:
        out_dtype = x2d.dtype
    out_itemsize = jnp.dtype(out_dtype).itemsize

    xb = x2d.astype(jnp.bfloat16)
    tm = _pick_tm(M, K, Nout, out_itemsize)
    grid_m = pl.cdiv(M, tm)

    cost = pl.CostEstimate(
        flops=2 * M * K * Nout,
        transcendentals=0,
        bytes_accessed=M * K * 2 + K * Nout * 2 + Nout * 4 + M * Nout * out_itemsize,
    )

    q, kv = pl.pallas_call(
        _fused_qkv_kernel,
        out_shape=(
            jax.ShapeDtypeStruct((M, inner), out_dtype),
            jax.ShapeDtypeStruct((M, 2 * inner), out_dtype),
        ),
        grid_spec=pltpu.PrefetchScalarGridSpec(
            num_scalar_prefetch=0,
            grid=(grid_m,),
            in_specs=[
                pl.BlockSpec((tm, K), lambda i: (i, 0)),
                pl.BlockSpec((K, inner), lambda i: (0, 0)),       # resident wq
                pl.BlockSpec((K, 2 * inner), lambda i: (0, 0)),   # resident wkv
                pl.BlockSpec((1, inner), lambda i: (0, 0)),       # resident bq
                pl.BlockSpec((1, 2 * inner), lambda i: (0, 0)),   # resident bkv
            ],
            out_specs=[
                pl.BlockSpec((tm, inner), lambda i: (i, 0)),
                pl.BlockSpec((tm, 2 * inner), lambda i: (i, 0)),
            ],
        ),
        compiler_params=pltpu.CompilerParams(
            dimension_semantics=("parallel",),
            vmem_limit_bytes=_VMEM_BUDGET,
        ),
        cost_estimate=cost,
    )(xb, wq_bf16, wkv_bf16, bq_f32row, bkv_f32row)
    return q, kv


# --------------------------------------------------------------------------
# Module
# --------------------------------------------------------------------------
class LinearProjectionPallas:
    """JAX/Pallas port of the PyTorch LinearProjection module."""

    def __init__(self, dim, heads=8, dim_head=64, bias=True, key=None):
        inner_dim = dim_head * heads
        self.heads = heads
        self.dim = dim
        self.inner_dim = inner_dim
        self.use_bias = bias

        if key is None:
            key = jax.random.PRNGKey(0)
        k1, k2, k3, k4 = jax.random.split(key, 4)
        scale = 1.0 / (dim ** 0.5)
        # Stored as (in_features, out_features): x @ W + b  ==  torch's x @ W.T + b
        self.wq = jax.random.uniform(k1, (dim, inner_dim), jnp.float32, -scale, scale)
        self.bq = (jax.random.uniform(k2, (inner_dim,), jnp.float32, -scale, scale)
                   if bias else jnp.zeros((inner_dim,), jnp.float32))
        self.wkv = jax.random.uniform(k3, (dim, inner_dim * 2), jnp.float32, -scale, scale)
        self.bkv = (jax.random.uniform(k4, (inner_dim * 2,), jnp.float32, -scale, scale)
                    if bias else jnp.zeros((inner_dim * 2,), jnp.float32))

        # Static kernel-side copies: bf16 weights (one-time cast, no per-call
        # HBM pass) and f32 row-vector biases.
        self.wq_bf16 = self.wq.astype(jnp.bfloat16)
        self.wkv_bf16 = self.wkv.astype(jnp.bfloat16)
        self.bq_row = self.bq.reshape(1, inner_dim).astype(jnp.float32)
        self.bkv_row = self.bkv.reshape(1, 2 * inner_dim).astype(jnp.float32)

    def __call__(self, x, attn_kv=None):
        B_, N, C = x.shape
        heads = self.heads
        d = C // heads
        # Same implicit constraint as the PyTorch reshape (C // heads grouping).
        assert self.inner_dim == heads * d, (
            "LinearProjection reshape requires inner_dim == heads * (C // heads)")

        if attn_kv is None:
            # Self-attention: fused q+kv projection, single kernel launch,
            # two separate outputs (no post-kernel slice of a concat slab).
            q_flat, kv_flat = fused_qkv_pallas(
                x.reshape(B_ * N, C), self.wq_bf16, self.wkv_bf16,
                self.bq_row, self.bkv_row, out_dtype=x.dtype)
            q = jnp.transpose(q_flat.reshape(B_, N, heads, d), (0, 2, 1, 3))
            kv = jnp.transpose(kv_flat.reshape(B_, N, 2, heads, d), (2, 0, 3, 1, 4))
            k, v = kv[0], kv[1]
        else:
            # Cross-attention: project the (N_kv, C) table ONCE; reshape /
            # transpose the single copy, batch-broadcast last (lazy).
            q_flat = linear_pallas(x.reshape(B_ * N, C), self.wq_bf16,
                                   self.bq_row, out_dtype=x.dtype)
            q = jnp.transpose(q_flat.reshape(B_, N, heads, d), (0, 2, 1, 3))
            N_kv = attn_kv.shape[0]
            kv_once = linear_pallas(attn_kv, self.wkv_bf16, self.bkv_row,
                                    out_dtype=x.dtype)            # (N_kv, 2*inner)
            kv1 = jnp.transpose(kv_once.reshape(N_kv, 2, heads, d),
                                (1, 2, 0, 3))                      # (2, h, N_kv, d)
            kv = jnp.broadcast_to(kv1[:, None], (2, B_, heads, N_kv, d))
            k, v = kv[0], kv[1]
        return q, k, v


if __name__ == "__main__":
    # Small shapes consistent with the module's C // heads reshape: dim == inner_dim.
    B, N, dim, heads = 2, 8, 32, 8
    dim_head = dim // heads  # 4 -> inner_dim = 32 = dim

    key = jax.random.PRNGKey(0)
    kx, kparams, kkv = jax.random.split(key, 3)
    x = jax.random.normal(kx, (B, N, dim), jnp.float32)

    mod = LinearProjectionPallas(dim, heads=heads, dim_head=dim_head, bias=True, key=kparams)

    # --- self-attention path ---
    q, k, v = mod(x)
    jax.block_until_ready((q, k, v))

    # Reference: bf16-input / f32-accumulate linears + identical reshape/permute.
    xf = x.reshape(B * N, dim).astype(jnp.bfloat16)
    q_ref = jnp.dot(xf, mod.wq_bf16, preferred_element_type=jnp.float32) + mod.bq
    kv_ref = jnp.dot(xf, mod.wkv_bf16, preferred_element_type=jnp.float32) + mod.bkv
    q_ref = jnp.transpose(q_ref.reshape(B, N, 1, heads, dim // heads), (2, 0, 3, 1, 4))[0]
    kv_ref = jnp.transpose(kv_ref.reshape(B, N, 2, heads, dim // heads), (2, 0, 3, 1, 4))

    assert q.shape == (B, heads, N, dim // heads)
    assert k.shape == (B, heads, N, dim // heads)
    assert v.shape == (B, heads, N, dim // heads)
    assert jnp.allclose(q, q_ref, atol=1e-2, rtol=1e-2)
    assert jnp.allclose(k, kv_ref[0], atol=1e-2, rtol=1e-2)
    assert jnp.allclose(v, kv_ref[1], atol=1e-2, rtol=1e-2)

    # --- cross-attention path (attn_kv provided) ---
    N_kv = 5
    attn_kv = jax.random.normal(kkv, (N_kv, dim), jnp.float32)
    q2, k2, v2 = mod(x, attn_kv=attn_kv)
    jax.block_until_ready((q2, k2, v2))

    kvf = attn_kv.astype(jnp.bfloat16)
    kv2_ref = jnp.dot(kvf, mod.wkv_bf16, preferred_element_type=jnp.float32) + mod.bkv
    kv2_ref = jnp.broadcast_to(kv2_ref[None], (B, N_kv, 2 * dim))
    kv2_ref = jnp.transpose(kv2_ref.reshape(B, N_kv, 2, heads, dim // heads), (2, 0, 3, 1, 4))
    assert k2.shape == (B, heads, N_kv, dim // heads)
    assert jnp.allclose(q2, q_ref, atol=1e-2, rtol=1e-2)
    assert jnp.allclose(k2, kv2_ref[0], atol=1e-2, rtol=1e-2)
    assert jnp.allclose(v2, kv2_ref[1], atol=1e-2, rtol=1e-2)

    print("KERNEL_OK")
</pallas_src>

<mosaic_0001>
module attributes {stable_mosaic.version = 11 : i64} {
  func.func @_fused_qkv_kernel(%arg0: i32, %arg1: memref<8x32xbf16, #tpu.memory_space<vmem>>, %arg2: memref<32x32xbf16, #tpu.memory_space<vmem>>, %arg3: memref<32x64xbf16, #tpu.memory_space<vmem>>, %arg4: memref<1x32xf32, #tpu.memory_space<vmem>>, %arg5: memref<1x64xf32, #tpu.memory_space<vmem>>, %arg6: memref<8x32xf32, #tpu.memory_space<vmem>>, %arg7: memref<8x64xf32, #tpu.memory_space<vmem>>) attributes {dimension_semantics = [#tpu.dimension_semantics<parallel>], iteration_bounds = array<i64: 2>, scalar_prefetch = 0 : i64, scratch_operands = 0 : i64, tpu.core_type = #tpu.core_type<tc>, window_params = [{transform_indices = @transform_0, window_bounds = array<i64: 8, 32>}, {pipeline_mode = #tpu.pipeline_mode<synchronous>, transform_indices = @transform_1, window_bounds = array<i64: 32, 32>}, {pipeline_mode = #tpu.pipeline_mode<synchronous>, transform_indices = @transform_2, window_bounds = array<i64: 32, 64>}, {pipeline_mode = #tpu.pipeline_mode<synchronous>, transform_indices = @transform_3, window_bounds = array<i64: 1, 32>}, {pipeline_mode = #tpu.pipeline_mode<synchronous>, transform_indices = @transform_4, window_bounds = array<i64: 1, 64>}, {transform_indices = @transform_5, window_bounds = array<i64: 8, 32>}, {transform_indices = @transform_6, window_bounds = array<i64: 8, 64>}]} {
    %c0 = arith.constant 0 : index
    %c0_0 = arith.constant 0 : index
    %0 = vector.load %arg1[%c0, %c0_0] : memref<8x32xbf16, #tpu.memory_space<vmem>>, vector<8x32xbf16>
    %c0_1 = arith.constant 0 : index
    %c0_2 = arith.constant 0 : index
    %1 = vector.load %arg2[%c0_1, %c0_2] : memref<32x32xbf16, #tpu.memory_space<vmem>>, vector<32x32xbf16>
    %cst = arith.constant dense<0.000000e+00> : vector<8x32xf32>
    %2 = tpu.matmul %0, %1, %cst {dimension_numbers = #tpu.dot_dimension_numbers<[1], [0], [0], [1], [0, 0, 1, 1], [], []>} : vector<8x32xbf16>, vector<32x32xbf16>, vector<8x32xf32> -> vector<8x32xf32>
    %c0_3 = arith.constant 0 : index
    %c0_4 = arith.constant 0 : index
    %3 = vector.load %arg4[%c0_3, %c0_4] : memref<1x32xf32, #tpu.memory_space<vmem>>, vector<1x32xf32>
    %4 = vector.broadcast %3 : vector<1x32xf32> to vector<8x32xf32>
    %5 = arith.addf %2, %4 : vector<8x32xf32>
    %c0_5 = arith.constant 0 : index
    %c0_6 = arith.constant 0 : index
    %6 = vector.load %arg6[%c0_5, %c0_6] : memref<8x32xf32, #tpu.memory_space<vmem>>, vector<8x32xf32>
    tpu.vector_store %arg6[%c0_5, %c0_6], %5 {strides = array<i32>} : memref<8x32xf32, #tpu.memory_space<vmem>>, vector<8x32xf32>,
    %c0_7 = arith.constant 0 : index
    %c0_8 = arith.constant 0 : index
    %7 = vector.load %arg3[%c0_7, %c0_8] : memref<32x64xbf16, #tpu.memory_space<vmem>>, vector<32x64xbf16>
    %cst_9 = arith.constant dense<0.000000e+00> : vector<8x64xf32>
    %8 = tpu.matmul %0, %7, %cst_9 {dimension_numbers = #tpu.dot_dimension_numbers<[1], [0], [0], [1], [0, 0, 1, 1], [], []>} : vector<8x32xbf16>, vector<32x64xbf16>, vector<8x64xf32> -> vector<8x64xf32>
    %c0_10 = arith.constant 0 : index
    %c0_11 = arith.constant 0 : index
    %9 = vector.load %arg5[%c0_10, %c0_11] : memref<1x64xf32, #tpu.memory_space<vmem>>, vector<1x64xf32>
    %10 = vector.broadcast %9 : vector<1x64xf32> to vector<8x64xf32>
    %11 = arith.addf %8, %10 : vector<8x64xf32>
    %c0_12 = arith.constant 0 : index
    %c0_13 = arith.constant 0 : index
    %12 = vector.load %arg7[%c0_12, %c0_13] : memref<8x64xf32, #tpu.memory_space<vmem>>, vector<8x64xf32>
    tpu.vector_store %arg7[%c0_12, %c0_13], %11 {strides = array<i32>} : memref<8x64xf32, #tpu.memory_space<vmem>>, vector<8x64xf32>,
    return
  }
  func.func @transform_0(%arg0: i32) -> (i32, i32) {
    %c0_i32 = arith.constant 0 : i32
    %c0_i32_0 = arith.constant 0 : i32
    return %arg0, %c0_i32 : i32, i32
  }
  func.func @transform_1(%arg0: i32) -> (i32, i32) {
    %c0_i32 = arith.constant 0 : i32
    %c0_i32_0 = arith.constant 0 : i32
    %c0_i32_1 = arith.constant 0 : i32
    return %c0_i32, %c0_i32_0 : i32, i32
  }
  func.func @transform_2(%arg0: i32) -> (i32, i32) {
    %c0_i32 = arith.constant 0 : i32
    %c0_i32_0 = arith.constant 0 : i32
    %c0_i32_1 = arith.constant 0 : i32
    return %c0_i32, %c0_i32_0 : i32, i32
  }
  func.func @transform_3(%arg0: i32) -> (i32, i32) {
    %c0_i32 = arith.constant 0 : i32
    %c0_i32_0 = arith.constant 0 : i32
    %c0_i32_1 = arith.constant 0 : i32
    return %c0_i32, %c0_i32_0 : i32, i32
  }
  func.func @transform_4(%arg0: i32) -> (i32, i32) {
    %c0_i32 = arith.constant 0 : i32
    %c0_i32_0 = arith.constant 0 : i32
    %c0_i32_1 = arith.constant 0 : i32
    return %c0_i32, %c0_i32_0 : i32, i32
  }
  func.func @transform_5(%arg0: i32) -> (i32, i32) {
    %c0_i32 = arith.constant 0 : i32
    %c0_i32_0 = arith.constant 0 : i32
    return %arg0, %c0_i32 : i32, i32
  }
  func.func @transform_6(%arg0: i32) -> (i32, i32) {
    %c0_i32 = arith.constant 0 : i32
    %c0_i32_0 = arith.constant 0 : i32
    return %arg0, %c0_i32 : i32, i32
  }
}

</mosaic_0001>

<llo_original>
// kernel: tpu_custom_call.1
$region0: #{tpu_custom_call.1}
  #allocation0 [shape = 'u32[]', space=smem, size = 0x4, offset = 0x4, fixed_abs, tag = 'smem constant byte address 0x4 - core index']
  #allocation1 [shape = 'u32[144,128]{1,0:T(1,128)}', space=vmem, size = 0x12000, scoped, tag = 'internal scratch']
  %s0 = inlined_call_operand.hbm [shape: bf16[16,32], index: 0, kind: input, shape index: {}]
  %s1 = inlined_call_operand.hbm [shape: bf16[32,32], index: 1, kind: input, shape index: {}]
  %s2 = inlined_call_operand.hbm [shape: bf16[32,64], index: 2, kind: input, shape index: {}]
  %s3 = inlined_call_operand.vmem [shape: f32[1,32], index: 3, kind: input, shape index: {}]
  %s4 = inlined_call_operand.vmem [shape: f32[1,64], index: 4, kind: input, shape index: {}]
  %s5 = inlined_call_operand.hbm [shape: f32[16,32], index: 5, kind: output, shape index: {0}]
  %s6 = inlined_call_operand.hbm [shape: f32[16,64], index: 6, kind: output, shape index: {1}]
  %7 = xla_tuple %s5, %s6
  %s8 = sld [smem:[#allocation0]]
  $region73: #{tpu_custom_call.1} parent=0
    _
  %s10 = ssub.s32 1, %s8
  %s11 = scalar_select 0, %s10, %s8
  $region1: #{tpu_custom_call.1} parent=0
    #allocation2 [shape = 'u8[4096]{0}', space=vmem, size = 0x1000, scoped, tag = 'input window, operand 0']
    #allocation3 [shape = 's32[2]{0}', space=sflag, size = 0x8, scoped, tag = 'scoped memory for tpu_custom_call.1']
    #allocation4 [shape = 's32[2]{0}', space=sflag, size = 0x8, scoped, tag = 'scoped memory for tpu_custom_call.1']
    #allocation5 [shape = 'u8[8192]{0}', space=vmem, size = 0x2000, scoped, tag = 'input window, operand 1, single buffered']
    #allocation6 [shape = 's32[1]{0}', space=sflag, size = 0x4, scoped, tag = 'scoped memory for tpu_custom_call.1']
    #allocation7 [shape = 'u8[8192]{0}', space=vmem, size = 0x2000, scoped, tag = 'input window, operand 2, single buffered']
    #allocation8 [shape = 'u8[8192]{0}', space=vmem, size = 0x2000, scoped, tag = 'output window, operand 0']
    #allocation9 [shape = 'u8[8192]{0}', space=vmem, size = 0x2000, scoped, tag = 'output window, operand 1']
    #allocation10 [shape = 's32[2]{0}', space=sflag, size = 0x8, scoped, tag = 'scoped memory for tpu_custom_call.1']
    %12 = vsyncpa [#allocation3], 0
    %s13 = scalar_lea.sflag [#allocation3], 1
    %14 = vsyncpa %s13, 0
    %15 = vsyncpa [#allocation6], 0
    %16 = vsyncpa [#allocation4], 0
    %s17 = scalar_lea.sflag [#allocation4], 1
    %18 = vsyncpa %s17, 0
    %19 = vsyncpa [#allocation10], 0
    %s20 = scalar_lea.sflag [#allocation10], 1
    %21 = vsyncpa %s20, 0
    loop: start=0, step=1, limit=4
    $region2: #{tpu_custom_call.1} parent=1 // loop_pre_header
      _
    $region3: #{tpu_custom_call.1} parent=1 // loop_header
      %s23 = sphi 0, %s27
      %p24 = scmp.ge.s32.totalorder %s23, 4
      %s33 = sphi 0, %s35
      %s36 = sphi 0, %s33
      %s37 = sphi 0, %s36
      %s53 = sphi 0, %s37
      %s57 = sphi 0, %s57
      %s59 = sphi 0, %s57
      %s60 = sphi 0, %s59
      %s74 = sphi 0, %s60
      %s78 = sphi 0, %s78
      %s80 = sphi 0, %s78
      %s81 = sphi 0, %s80
      %s95 = sphi 0, %s81
      %s99 = sphi 0, %s99
      %s101 = sphi 0, %s99
      %s102 = sphi 0, %s101
      %s116 = sphi 0, %s102
      %s120 = sphi 0, %s120
      %s122 = sphi 0, %s120
      %s123 = sphi 0, %s122
      %s137 = sphi 0, %s123
      %s143 = sphi 0, %s145
      %s146 = sphi 0, %s143
      %s147 = sphi 0, %s146
      %s163 = sphi 0, %s147
      %s169 = sphi 0, %s171
      %s172 = sphi 0, %s169
      %s173 = sphi 0, %s172
      %s189 = sphi 0, %s173
    $region4: #{tpu_custom_call.1} parent=1 // loop_header_branch
      %26 = sbr.rel (%p24) target = $region8
    $region5: #{tpu_custom_call.1} parent=1 // loop_body
      %s28 = ssub.s32 %s23, 1
      %s29 = ssub.s32 %s23, 2
      %s30 = sadd.s32 %s23, 1
      %s31 = ssub.s32 %s23, %s30
      %p32 = scmp.eq.s32.totalorder %s31, 0
      %s34 = sadd.s32 %s33, 1
      %s35 = scalar_select %p32, %s33, %s34
      %p38 = pneg %p32
      %p39 = scmp.eq.s32.totalorder %s23, 1
      %p40 = por %p38, %p39
      %p41 = scmp.ne.s32.totalorder %s33, %s36
      %p42 = scmp.eq.s32.totalorder %s23, 0
      %p43 = por %p41, %p42
      %p44 = scmp.ne.s32.totalorder %s33, %s36
      %p45 = scmp.eq.s32.totalorder %s28, 1
      %p46 = por %p44, %p45
      %p47 = scmp.ne.s32.totalorder %s36, %s37
      %p48 = scmp.eq.s32.totalorder %s28, 0
      %p49 = por %p47, %p48
      %p50 = scmp.ne.s32.totalorder %s36, %s37
      %p51 = scmp.eq.s32.totalorder %s29, 1
      %p52 = por %p50, %p51
      %p54 = scmp.ne.s32.totalorder %s37, %s53
      %p55 = scmp.eq.s32.totalorder %s29, 0
      %p56 = por %p54, %p55
      %s58 = sadd.s32 %s57, 1
      %p61 = scmp.eq.s32.totalorder %s23, 1
      %p62 = scmp.ne.s32.totalorder %s57, %s59
      %p63 = scmp.eq.s32.totalorder %s23, 0
      %p64 = por %p62, %p63
      %p65 = scmp.ne.s32.totalorder %s57, %s59
      %p66 = scmp.eq.s32.totalorder %s28, 1
      %p67 = por %p65, %p66
      %p68 = scmp.ne.s32.totalorder %s59, %s60
      %p69 = scmp.eq.s32.totalorder %s28, 0
      %p70 = por %p68, %p69
      %p71 = scmp.ne.s32.totalorder %s59, %s60
      %p72 = scmp.eq.s32.totalorder %s29, 1
      %p73 = por %p71, %p72
      %p75 = scmp.ne.s32.totalorder %s60, %s74
      %p76 = scmp.eq.s32.totalorder %s29, 0
      %p77 = por %p75, %p76
      %s79 = sadd.s32 %s78, 1
      %p82 = scmp.eq.s32.totalorder %s23, 1
      %p83 = scmp.ne.s32.totalorder %s78, %s80
      %p84 = scmp.eq.s32.totalorder %s23, 0
      %p85 = por %p83, %p84
      %p86 = scmp.ne.s32.totalorder %s78, %s80
      %p87 = scmp.eq.s32.totalorder %s28, 1
      %p88 = por %p86, %p87
      %p89 = scmp.ne.s32.totalorder %s80, %s81
      %p90 = scmp.eq.s32.totalorder %s28, 0
      %p91 = por %p89, %p90
      %p92 = scmp.ne.s32.totalorder %s80, %s81
      %p93 = scmp.eq.s32.totalorder %s29, 1
      %p94 = por %p92, %p93
      %p96 = scmp.ne.s32.totalorder %s81, %s95
      %p97 = scmp.eq.s32.totalorder %s29, 0
      %p98 = por %p96, %p97
      %s100 = sadd.s32 %s99, 1
      %p103 = scmp.eq.s32.totalorder %s23, 1
      %p104 = scmp.ne.s32.totalorder %s99, %s101
      %p105 = scmp.eq.s32.totalorder %s23, 0
      %p106 = por %p104, %p105
      %p107 = scmp.ne.s32.totalorder %s99, %s101
      %p108 = scmp.eq.s32.totalorder %s28, 1
      %p109 = por %p107, %p108
      %p110 = scmp.ne.s32.totalorder %s101, %s102
      %p111 = scmp.eq.s32.totalorder %s28, 0
      %p112 = por %p110, %p111
      %p113 = scmp.ne.s32.totalorder %s101, %s102
      %p114 = scmp.eq.s32.totalorder %s29, 1
      %p115 = por %p113, %p114
      %p117 = scmp.ne.s32.totalorder %s102, %s116
      %p118 = scmp.eq.s32.totalorder %s29, 0
      %p119 = por %p117, %p118
      %s121 = sadd.s32 %s120, 1
      %p124 = scmp.eq.s32.totalorder %s23, 1
      %p125 = scmp.ne.s32.totalorder %s120, %s122
      %p126 = scmp.eq.s32.totalorder %s23, 0
      %p127 = por %p125, %p126
      %p128 = scmp.ne.s32.totalorder %s120, %s122
      %p129 = scmp.eq.s32.totalorder %s28, 1
      %p130 = por %p128, %p129
      %p131 = scmp.ne.s32.totalorder %s122, %s123
      %p132 = scmp.eq.s32.totalorder %s28, 0
      %p133 = por %p131, %p132
      %p134 = scmp.ne.s32.totalorder %s122, %s123
      %p135 = scmp.eq.s32.totalorder %s29, 1
      %p136 = por %p134, %p135
      %p138 = scmp.ne.s32.totalorder %s123, %s137
      %p139 = scmp.eq.s32.totalorder %s29, 0
      %p140 = por %p138, %p139
      %s141 = ssub.s32 %s23, %s30
      %p142 = scmp.eq.s32.totalorder %s141, 0
      %s144 = sadd.s32 %s143, 1
      %s145 = scalar_select %p142, %s143, %s144
      %p148 = pneg %p142
      %p149 = scmp.eq.s32.totalorder %s23, 1
      %p150 = por %p148, %p149
      %p151 = scmp.ne.s32.totalorder %s143, %s146
      %p152 = scmp.eq.s32.totalorder %s23, 0
      %p153 = por %p151, %p152
      %p154 = scmp.ne.s32.totalorder %s143, %s146
      %p155 = scmp.eq.s32.totalorder %s28, 1
      %p156 = por %p154, %p155
      %p157 = scmp.ne.s32.totalorder %s146, %s147
      %p158 = scmp.eq.s32.totalorder %s28, 0
      %p159 = por %p157, %p158
      %p160 = scmp.ne.s32.totalorder %s146, %s147
      %p161 = scmp.eq.s32.totalorder %s29, 1
      %p162 = por %p160, %p161
      %p164 = scmp.ne.s32.totalorder %s147, %s163
      %p165 = scmp.eq.s32.totalorder %s29, 0
      %p166 = por %p164, %p165
      %s167 = ssub.s32 %s23, %s30
      %p168 = scmp.eq.s32.totalorder %s167, 0
      %s170 = sadd.s32 %s169, 1
      %s171 = scalar_select %p168, %s169, %s170
      %p174 = pneg %p168
      %p175 = scmp.eq.s32.totalorder %s23, 1
      %p176 = por %p174, %p175
      %p177 = scmp.ne.s32.totalorder %s169, %s172
      %p178 = scmp.eq.s32.totalorder %s23, 0
      %p179 = por %p177, %p178
      %p180 = scmp.ne.s32.totalorder %s169, %s172
      %p181 = scmp.eq.s32.totalorder %s28, 1
      %p182 = por %p180, %p181
      %p183 = scmp.ne.s32.totalorder %s172, %s173
      %p184 = scmp.eq.s32.totalorder %s28, 0
      %p185 = por %p183, %p184
      %p186 = scmp.ne.s32.totalorder %s172, %s173
      %p187 = scmp.eq.s32.totalorder %s29, 1
      %p188 = por %p186, %p187
      %p190 = scmp.ne.s32.totalorder %s173, %s189
      %p191 = scmp.eq.s32.totalorder %s29, 0
      %p192 = por %p190, %p191
      %p193 = scmp.le.s32.totalorder 1, %s23
      %p194 = scmp.lt.s32.totalorder %s23, 3
      %p195 = pnand %p193, %p194
      %p196 = pneg %p195
      // Predicated region
      $region9: #{tpu_custom_call.1} parent=5 // pred_check
        _
      $region10: #{tpu_custom_call.1} parent=5 // pred_check_branch
        %198 = sbr.rel (%p195) target = $region12
      $region11: #{tpu_custom_call.1} parent=5 // pred_region
        %s199 = ssub.s32 %s23, 1
        // Predicated region
        $region13: #{tpu_custom_call.1} parent=11 // pred_check
          %p200 = pneg %p70
        $region14: #{tpu_custom_call.1} parent=11 // pred_check_branch
          %202 = sbr.rel (%p200) target = $region16
        $region15: #{tpu_custom_call.1} parent=11 // pred_region
          %s204 = ssub.s32 256, 256
          %205 = vsyncadd [#allocation6], %s204
          %s206 = sshll.u32 [#allocation5], 4
          %s207 = int_to_ptr.vmem [resolvable:$true] %s206
          %212 = dma.hbm_to_vmem [thread:$0]  %s1, 256, %s207, [#allocation6], 64, 64, 4
        $region16: #{tpu_custom_call.1} parent=11 // pred_fallthru
          _
        // Predicated region
        $region17: #{tpu_custom_call.1} parent=11 // pred_check
          %p213 = pneg %p91
        $region18: #{tpu_custom_call.1} parent=11 // pred_check_branch
          %215 = sbr.rel (%p213) target = $region20
        $region19: #{tpu_custom_call.1} parent=11 // pred_region
          %s217 = ssub.s32 256, 256
          %218 = vsyncadd [#allocation6], %s217
          %s219 = sshll.u32 [#allocation7], 4
          %s220 = int_to_ptr.vmem [resolvable:$true] %s219
          %225 = dma.hbm_to_vmem [thread:$0]  %s2, 256, %s220, [#allocation6], 64, 64, 4
        $region20: #{tpu_custom_call.1} parent=11 // pred_fallthru
          _
        // Predicated region
        $region21: #{tpu_custom_call.1} parent=11 // pred_check
          %p226 = pneg %p112
        $region22: #{tpu_custom_call.1} parent=11 // pred_check_branch
          %228 = sbr.rel (%p226) target = $region24
        $region23: #{tpu_custom_call.1} parent=11 // pred_region
          _
        $region24: #{tpu_custom_call.1} parent=11 // pred_fallthru
          _
        // Predicated region
        $region25: #{tpu_custom_call.1} parent=11 // pred_check
          %p229 = pneg %p133
        $region26: #{tpu_custom_call.1} parent=11 // pred_check_branch
          %231 = sbr.rel (%p229) target = $region28
        $region27: #{tpu_custom_call.1} parent=11 // pred_region
          _
        $region28: #{tpu_custom_call.1} parent=11 // pred_fallthru
          _
      $region12: #{tpu_custom_call.1} parent=5 // pred_fallthru
        _
      %p232 = scmp.lt.s32.totalorder %s23, 2
      // Predicated region
      $region29: #{tpu_custom_call.1} parent=5 // pred_check
        %p233 = pneg %p232
      $region30: #{tpu_custom_call.1} parent=5 // pred_check_branch
        %235 = sbr.rel (%p233) target = $region32
      $region31: #{tpu_custom_call.1} parent=5 // pred_region
        // Predicated region
        $region33: #{tpu_custom_call.1} parent=31 // pred_check
          %p236 = pneg %p43
        $region34: #{tpu_custom_call.1} parent=31 // pred_check_branch
          %238 = sbr.rel (%p236) target = $region36
        $region35: #{tpu_custom_call.1} parent=31 // pred_region
          %s239 = sand.u32 %s33, 1
          %s240 = scalar_lea.sflag [#allocation3], %s239
          %s241 = sand.u32 %s33, 1
          %s242 = smul.addr %s241, 4
          %s243 = scalar_lea.vmem [#allocation2], %s242
          %s245 = ssub.s32 64, 64
          %246 = vsyncadd %s240, %s245
          %s247 = smul.addr %s23, 64
          %s248 = scalar_lea.hbm %s0, %s247
          %s250 = sshll.u32 %s243, 4
          %s251 = int_to_ptr.vmem [resolvable:$true] %s250
          %253 = dma.hbm_to_vmem [thread:$0]  %s248, 64, %s251, %s240
        $region36: #{tpu_custom_call.1} parent=31 // pred_fallthru
          _
      $region32: #{tpu_custom_call.1} parent=5 // pred_fallthru
        _
      %p254 = scmp.le.s32.totalorder 1, %s23
      %p255 = scmp.lt.s32.totalorder %s23, 3
      %p256 = pnand %p254, %p255
      %p257 = pneg %p256
      // Predicated region
      $region37: #{tpu_custom_call.1} parent=5 // pred_check
        _
      $region38: #{tpu_custom_call.1} parent=5 // pred_check_branch
        %259 = sbr.rel (%p256) target = $region40
      $region39: #{tpu_custom_call.1} parent=5 // pred_region
        %s260 = ssub.s32 %s23, 1
        %s261 = sand.u32 %s36, 1
        %s262 = scalar_lea.sflag [#allocation3], %s261
        %s263 = sand.u32 %s36, 1
        %s264 = smul.addr %s263, 4
        %s265 = scalar_lea.vmem [#allocation2], %s264
        // Predicated region
        $region41: #{tpu_custom_call.1} parent=39 // pred_check
          %p266 = pneg %p49
        $region42: #{tpu_custom_call.1} parent=39 // pred_check_branch
          %268 = sbr.rel (%p266) target = $region44
        $region43: #{tpu_custom_call.1} parent=39 // pred_region
          %269 = dma.done %s262, 64
        $region44: #{tpu_custom_call.1} parent=39 // pred_fallthru
          _
        // Predicated region
        $region45: #{tpu_custom_call.1} parent=39 // pred_check
          %p270 = pneg %p70
        $region46: #{tpu_custom_call.1} parent=39 // pred_check_branch
          %272 = sbr.rel (%p270) target = $region48
        $region47: #{tpu_custom_call.1} parent=39 // pred_region
          %273 = dma.done [#allocation6], 256
        $region48: #{tpu_custom_call.1} parent=39 // pred_fallthru
          _
        // Predicated region
        $region49: #{tpu_custom_call.1} parent=39 // pred_check
          %p274 = pneg %p91
        $region50: #{tpu_custom_call.1} parent=39 // pred_check_branch
          %276 = sbr.rel (%p274) target = $region52
        $region51: #{tpu_custom_call.1} parent=39 // pred_region
          %277 = dma.done [#allocation6], 256
        $region52: #{tpu_custom_call.1} parent=39 // pred_fallthru
          _
        %s278 = sand.u32 %s36, 1
        %s279 = scalar_lea.sflag [#allocation3], %s278
        %s280 = sand.u32 %s36, 1
        %s281 = smul.addr %s280, 4
        %s282 = scalar_lea.vmem [#allocation2], %s281
        %p283 = pneg %p49
        %p284 = pneg %p46
        %p285 = pneg %p70
        %p286 = pneg %p67
        %p287 = pneg %p91
        %p288 = pneg %p88
        %p289 = pneg %p112
        %p290 = pneg %p109
        %p291 = pneg %p133
        %p292 = pneg %p130
        %p293 = pneg %p159
        %p294 = pneg %p156
        %s295 = sand.u32 %s146, 1
        %s296 = scalar_lea.sflag [#allocation4], %s295
        %s297 = sand.u32 %s146, 1
        %s298 = smul.addr %s297, 8
        %s299 = scalar_lea.vmem [#allocation8], %s298
        %p300 = pneg %p185
        %p301 = pneg %p182
        %s302 = sand.u32 %s172, 1
        %s303 = scalar_lea.sflag [#allocation10], %s302
        %s304 = sand.u32 %s172, 1
        %s305 = smul.addr %s304, 8
        %s306 = scalar_lea.vmem [#allocation9], %s305
        %v308 = vld [vmem:[%s265] sm:$0xf]
        %v309 = vld [vmem:[#allocation5] sm:$0xf]
        %v310 = vld [vmem:[#allocation5 + $0x4] sm:$0xf]
        %v311 = vld [vmem:[#allocation5 + $0x8] sm:$0xf]
        %v312 = vld [vmem:[#allocation5 + $0xc] sm:$0xf]
        %v313 = vld [vmem:[%s3] sm:$0x1]
        %v315 = vlaneseq
        %v316 = vshrl.u32 %v315, 7
        %v317 = vsub.s32 0, %v316
        %v318 = vrot.slane %v313, %v317
        %v324 = vunpack.c.l.b16 %v309
        %v325 = vunpack.c.l.b16 %v310
        %v326 = vunpack.c.l.b16 %v311
        %v327 = vunpack.c.l.b16 %v312
        %v328 = vpack.c.b16 %v325, %v324
        %v329 = vpack.c.b16 %v327, %v326
        %vm332 = vcmask 261120
        %v334 = vsel %vm332, %v308, 0
        %336 = vmatprep.subr.bf16.mxu0 0
        %337 = vmatpush1.bf16.msra.mxu0 %v328
        %338 = vmatprep.subr.bf16.mxu0 0
        %339 = vmatpush1.bf16.msra.mxu0 %v329
        %340 = vmatprep.subr.bf16.mxu0 0
        %341 = vmatpush1.bf16.msra.mxu0 0
        %342 = vmatprep.subr.bf16.mxu0 0
        %343 = vmatpush1.bf16.msra.mxu0 0
        %344 = vmatprep.subr.bf16.mxu0 0
        %345 = vmatpush1.bf16.msra.mxu0 0
        %346 = vmatprep.subr.bf16.mxu0 0
        %347 = vmatpush1.bf16.msra.mxu0 0
        %348 = vmatprep.subr.bf16.mxu0 0
        %349 = vmatpush1.bf16.msra.mxu0 0
        %350 = vmatprep.subr.bf16.mxu0 0
        %351 = vmatpush1.bf16.msra.mxu0 0
        %352 = vmatprep.subr.bf16.mxu0 0
        %353 = vmatpush1.bf16.msra.mxu0 0
        %354 = vmatprep.subr.bf16.mxu0 0
        %355 = vmatpush1.bf16.msra.mxu0 0
        %356 = vmatprep.subr.bf16.mxu0 0
        %357 = vmatpush1.bf16.msra.mxu0 0
        %358 = vmatprep.subr.bf16.mxu0 0
        %359 = vmatpush1.bf16.msra.mxu0 0
        %360 = vmatprep.subr.bf16.mxu0 0
        %361 = vmatpush1.bf16.msra.mxu0 0
        %362 = vmatprep.subr.bf16.mxu0 0
        %363 = vmatpush1.bf16.msra.mxu0 0
        %364 = vmatprep.subr.bf16.mxu0 0
        %365 = vmatpush1.bf16.msra.mxu0 0
        %366 = vmatprep.subr.bf16.mxu0 0
        %367 = vmatpush1.bf16.msra.mxu0 0
        %368 = vmatprep.mubr.bf16.mxu0 0
        %369 = vmatmul.mubr.bf16.gmra.mrb[0].mxu0 %v334
        %v370 = vpop.f32.mrb[0].mxu0
        %v371 = vadd.f32 %v318, %v370
        %v372 = vpop.f32.mrb[0].mxu0
        %v373 = vpop.f32.mrb[0].mxu0
        %v374 = vpop.f32.mrb[0].mxu0
        %375 = vdwg.mxu0
        %376 = vst.msk [vmem:[%s299] sm:$0xff] %vm332, %v371
        %v377 = vld [vmem:[#allocation7] sm:$0xf]
        %v378 = vld [vmem:[#allocation7 + $0x4] sm:$0xf]
        %v379 = vld [vmem:[#allocation7 + $0x8] sm:$0xf]
        %v380 = vld [vmem:[#allocation7 + $0xc] sm:$0xf]
        %v381 = vld [vmem:[%s4] sm:$0x1]
        %v383 = vlaneseq
        %v384 = vshrl.u32 %v383, 7
        %v385 = vsub.s32 0, %v384
        %v386 = vrot.slane %v381, %v385
        %v392 = vunpack.c.l.b16 %v377
        %v393 = vunpack.c.l.b16 %v378
        %v394 = vunpack.c.l.b16 %v379
        %v395 = vunpack.c.l.b16 %v380
        %v396 = vpack.c.b16 %v393, %v392
        %v397 = vpack.c.b16 %v395, %v394
        %400 = vmatprep.subr.bf16.mxu0 0
        %401 = vmatpush1.bf16.msra.mxu0 %v396
        %402 = vmatprep.subr.bf16.mxu0 0
        %403 = vmatpush1.bf16.msra.mxu0 %v397
        %404 = vmatprep.subr.bf16.mxu0 0
        %405 = vmatpush1.bf16.msra.mxu0 0
        %406 = vmatprep.subr.bf16.mxu0 0
        %407 = vmatpush1.bf16.msra.mxu0 0
        %408 = vmatprep.subr.bf16.mxu0 0
        %409 = vmatpush1.bf16.msra.mxu0 0
        %410 = vmatprep.subr.bf16.mxu0 0
        %411 = vmatpush1.bf16.msra.mxu0 0
        %412 = vmatprep.subr.bf16.mxu0 0
        %413 = vmatpush1.bf16.msra.mxu0 0
        %414 = vmatprep.subr.bf16.mxu0 0
        %415 = vmatpush1.bf16.msra.mxu0 0
        %416 = vmatprep.subr.bf16.mxu0 0
        %417 = vmatpush1.bf16.msra.mxu0 0
        %418 = vmatprep.subr.bf16.mxu0 0
        %419 = vmatpush1.bf16.msra.mxu0 0
        %420 = vmatprep.subr.bf16.mxu0 0
        %421 = vmatpush1.bf16.msra.mxu0 0
        %422 = vmatprep.subr.bf16.mxu0 0
        %423 = vmatpush1.bf16.msra.mxu0 0
        %424 = vmatprep.subr.bf16.mxu0 0
        %425 = vmatpush1.bf16.msra.mxu0 0
        %426 = vmatprep.subr.bf16.mxu0 0
        %427 = vmatpush1.bf16.msra.mxu0 0
        %428 = vmatprep.subr.bf16.mxu0 0
        %429 = vmatpush1.bf16.msra.mxu0 0
        %430 = vmatprep.subr.bf16.mxu0 0
        %431 = vmatpush1.bf16.msra.mxu0 0
        %432 = vmatprep.mubr.bf16.mxu0 0
        %433 = vmatmul.mubr.bf16.gmra.mrb[0].mxu0 %v334
        %v434 = vpop.f32.mrb[0].mxu0
        %v435 = vadd.f32 %v386, %v434
        %v436 = vpop.f32.mrb[0].mxu0
        %v437 = vpop.f32.mrb[0].mxu0
        %v438 = vpop.f32.mrb[0].mxu0
        %439 = vdwg.mxu0
        %vm440 = vcmask 523264
        %441 = vst.msk [vmem:[%s306] sm:$0xff] %vm440, %v435
        %s442 = sand.u32 %s146, 1
        %s443 = scalar_lea.sflag [#allocation4], %s442
        %s444 = sand.u32 %s146, 1
        %s445 = smul.addr %s444, 8
        %s446 = scalar_lea.vmem [#allocation8], %s445
        %s447 = sand.u32 %s172, 1
        %s448 = scalar_lea.sflag [#allocation10], %s447
        %s449 = sand.u32 %s172, 1
        %s450 = smul.addr %s449, 8
        %s451 = scalar_lea.vmem [#allocation9], %s450
        // Predicated region
        $region53: #{tpu_custom_call.1} parent=39 // pred_check
          %p452 = pneg %p156
        $region54: #{tpu_custom_call.1} parent=39 // pred_check_branch
          %454 = sbr.rel (%p452) target = $region56
        $region55: #{tpu_custom_call.1} parent=39 // pred_region
          %s456 = ssub.s32 128, 128
          %457 = vsyncadd %s443, %s456
          %s458 = smul.addr %s28, 128
          %s459 = scalar_lea.hbm %s5, %s458
          %s461 = sshll.u32 %s446, 4
          %s462 = int_to_ptr.vmem [resolvable:$true] %s461
          %464 = dma.vmem_to_hbm [thread:$0]  %s462, 128, %s459, %s443
        $region56: #{tpu_custom_call.1} parent=39 // pred_fallthru
          _
        // Predicated region
        $region57: #{tpu_custom_call.1} parent=39 // pred_check
          %p465 = pneg %p182
        $region58: #{tpu_custom_call.1} parent=39 // pred_check_branch
          %467 = sbr.rel (%p465) target = $region60
        $region59: #{tpu_custom_call.1} parent=39 // pred_region
          %s469 = ssub.s32 128, 128
          %470 = vsyncadd %s448, %s469
          %s471 = smul.addr %s28, 128
          %s472 = scalar_lea.hbm %s6, %s471
          %s474 = sshll.u32 %s451, 4
          %s475 = int_to_ptr.vmem [resolvable:$true] %s474
          %477 = dma.vmem_to_hbm [thread:$0]  %s475, 128, %s472, %s448
        $region60: #{tpu_custom_call.1} parent=39 // pred_fallthru
          _
      $region40: #{tpu_custom_call.1} parent=5 // pred_fallthru
        _
      %p478 = scmp.le.s32.totalorder 2, %s23
      // Predicated region
      $region61: #{tpu_custom_call.1} parent=5 // pred_check
        %p479 = pneg %p478
      $region62: #{tpu_custom_call.1} parent=5 // pred_check_branch
        %481 = sbr.rel (%p479) target = $region64
      $region63: #{tpu_custom_call.1} parent=5 // pred_region
        %s482 = ssub.s32 %s23, 2
        // Predicated region
        $region65: #{tpu_custom_call.1} parent=63 // pred_check
          %p483 = pneg %p162
        $region66: #{tpu_custom_call.1} parent=63 // pred_check_branch
          %485 = sbr.rel (%p483) target = $region68
        $region67: #{tpu_custom_call.1} parent=63 // pred_region
          %s486 = sand.u32 %s147, 1
          %s487 = scalar_lea.sflag [#allocation4], %s486
          %s488 = sand.u32 %s147, 1
          %s489 = smul.addr %s488, 8
          %s490 = scalar_lea.vmem [#allocation8], %s489
          %491 = dma.done %s487, 128
        $region68: #{tpu_custom_call.1} parent=63 // pred_fallthru
          _
        // Predicated region
        $region69: #{tpu_custom_call.1} parent=63 // pred_check
          %p492 = pneg %p188
        $region70: #{tpu_custom_call.1} parent=63 // pred_check_branch
          %494 = sbr.rel (%p492) target = $region72
        $region71: #{tpu_custom_call.1} parent=63 // pred_region
          %s495 = sand.u32 %s173, 1
          %s496 = scalar_lea.sflag [#allocation10], %s495
          %s497 = sand.u32 %s173, 1
          %s498 = smul.addr %s497, 8
          %s499 = scalar_lea.vmem [#allocation9], %s498
          %500 = dma.done %s496, 128
        $region72: #{tpu_custom_call.1} parent=63 // pred_fallthru
          _
      $region64: #{tpu_custom_call.1} parent=5 // pred_fallthru
        _
    $region6: #{tpu_custom_call.1} parent=1 // loop_footer
      %s27 = sadd.s32 1, %s23
    $region7: #{tpu_custom_call.1} parent=1 // loop_footer_branch
      %22 = sbr.rel target = $region3
    $region8: #{tpu_custom_call.1} parent=1 // loop_exit
      _
    %501 = vsyncpa [#allocation3], 1
    %s502 = scalar_lea.sflag [#allocation3], 1
    %503 = vsyncpa %s502, 1
    %504 = vsyncpa [#allocation6], 1
    %505 = vsyncpa [#allocation4], 1
    %s506 = scalar_lea.sflag [#allocation4], 1
    %507 = vsyncpa %s506, 1
    %508 = vsyncpa [#allocation10], 1
    %s509 = scalar_lea.sflag [#allocation10], 1
    %510 = vsyncpa %s509, 1

</llo_original>
